<compile_context>
chip_gen: v7x
topology: tpu7x:2x2x1
jax: 0.10.0
libtpu: 0.0.40
codegen_flags: <defaults>
</compile_context>

<pallas_src>
import functools

import jax
import jax.numpy as jnp
from jax.experimental import pallas as pl
from jax.experimental.pallas import tpu as pltpu


def _round_up(x, mult):
    return ((x + mult - 1) // mult) * mult


# --------------------------------------------------------------------------- #
# Flat GEMM + bias kernel (hoisted, loop-invariant projections):
#   pctx_       = conv_UaC(context):  (B*H*W, D) @ (D, A)  + (UaC_b + UfC_b)
#   state_below = fc_Wy*(emb):        (T*B, 2m) @ (2m, 3n) + b
# --------------------------------------------------------------------------- #
def _linear_kernel(x_ref, w_ref, b_ref, o_ref):
    o_ref[...] = (jnp.dot(x_ref[...], w_ref[...],
                          preferred_element_type=jnp.float32) + b_ref[...])


def _flat_linear(x, w, b, tile_m=512):
    M, K = x.shape
    N = w.shape[1]
    tm = min(tile_m, _round_up(M, 8))
    Mp = pl.cdiv(M, tm) * tm
    if Mp != M:
        x = jnp.pad(x, ((0, Mp - M), (0, 0)))
    out = pl.pallas_call(
        _linear_kernel,
        grid=(Mp // tm,),
        in_specs=[pl.BlockSpec((tm, K), lambda i: (i, 0)),
                  pl.BlockSpec((K, N), lambda i: (0, 0)),
                  pl.BlockSpec((1, N), lambda i: (0, 0))],
        out_specs=pl.BlockSpec((tm, N), lambda i: (i, 0)),
        out_shape=jax.ShapeDtypeStruct((Mp, N), jnp.float32),
        compiler_params=pltpu.CompilerParams(dimension_semantics=("parallel",)),
    )(x, w, b)
    return out[:M]


# --------------------------------------------------------------------------- #
# One GRU-cond step per grid iteration (grid axis = decoding step).
# --------------------------------------------------------------------------- #
def _gru_cond_step_kernel(
        init_ref, sb_ref, lym_ref, ctx_ref, cmask_ref, pctx_ref,
        wm9_ref, u0_ref, wacu2_ref, u2b_ref, vacw_ref, vacb_ref, wc_ref,
        state_out, alpha_out,
        h_ref, ap_ref, *, offs):
    i = pl.program_id(0)
    B, n = h_ref.shape
    HW = ap_ref.shape[1]
    D = ctx_ref.shape[1]
    A = pctx_ref.shape[1]

    @pl.when(i == 0)
    def _init():
        h_ref[...] = init_ref[...]
        ap_ref[...] = jnp.zeros_like(ap_ref)

    h_ = h_ref[...]                       # (B, n)   f32 carry
    ap_ = ap_ref[...]                     # (B, HW)  f32 carry (lane-dense alpha_past)
    lm = lym_ref[0]                       # (B, 1)
    sb = sb_ref[0]                        # (B, 3n)  precomputed state_below[i]

    # ---- GRU cell 0 (fc_Uhz0 / fc_Uhr0 / fc_Uhh0; state_below hoisted) ----
    u0h = jnp.dot(h_, u0_ref[...], preferred_element_type=jnp.float32)    # (B, 3n)
    z0 = jax.nn.sigmoid(u0h[:, :n] + sb[:, :n])
    r0 = jax.nn.sigmoid(u0h[:, n:2 * n] + sb[:, n:2 * n])
    h0_p = jnp.tanh(u0h[:, 2 * n:] * r0 + sb[:, 2 * n:])
    h0 = z0 * h_ + (1.0 - z0) * h0_p
    h0 = lm * h0 + (1.0 - lm) * h_

    # ---- fused h0 projections: attention query (A) + GRU-2 Uh gates (3n) ----
    proj = jnp.dot(h0, wacu2_ref[...], preferred_element_type=jnp.float32)  # (B, A+3n)
    query = proj[:, :A]
    u2h = proj[:, A:] + u2b_ref[...]

    # ---- attention pre-activation: pctx (+UaC_b+UfC_b) + query + coverage ----
    # Coverage: 9 pltpu.roll taps of alpha_past (HW on lanes, boundary mask folded
    # into wm9), accumulated as rank-1 VPU FMAs in the (B, A, HW) layout.
    pre = pctx_ref[...].astype(jnp.float32) + query[:, :, None]          # (B, A, HW)
    for k, off in enumerate(offs):
        tap = ap_ if off == 0 else pltpu.roll(ap_, shift=(-off) % HW, axis=1)
        pre = pre + wm9_ref[k][None, :, :] * tap[:, None, :]

    # TODO(synk): bf16 tanh here on v6e/v7x (EUP bf16); keep f32 on v5e.
    score = jnp.tanh(pre)                                                # (B, A, HW)
    logit = (jnp.sum(score * vacw_ref[...][None, :, :], axis=1)          # sublane reduce
             + vacb_ref[0, 0])                                           # (B, HW)
    logit = logit - jnp.max(logit, axis=1, keepdims=True)                # per-row max
    calpha = jnp.exp(logit) * cmask_ref[...]
    denom = jnp.sum(calpha, axis=1, keepdims=True)                       # (B, 1)
    calpha = calpha / denom + 1e-10

    ap_new = ap_ + calpha

    # ctC: VPU multiply + lane reduce over HW (bf16 ctx promoted to f32).
    ctC = jnp.sum(ctx_ref[...] * calpha[:, None, :], axis=2)             # (B, D) f32

    # ---- GRU cell 2 (fc_Uh*2 + fc_Wc*) ----
    wcc = jnp.dot(ctC, wc_ref[...], preferred_element_type=jnp.float32)  # (B, 3n)
    z2 = jax.nn.sigmoid(u2h[:, :n] + wcc[:, :n])
    r2 = jax.nn.sigmoid(u2h[:, n:2 * n] + wcc[:, n:2 * n])
    h2_p = jnp.tanh(u2h[:, 2 * n:] * r2 + wcc[:, 2 * n:])
    h2 = z2 * h0 + (1.0 - z2) * h2_p
    h2 = lm * h2 + (1.0 - lm) * h0

    # ---- carries + lane-dense packed per-step outputs ----
    h_ref[...] = h2
    ap_ref[...] = ap_new

    P1 = state_out.shape[2]
    parts = [h2, ctC]
    if P1 > n + D:
        parts.append(jnp.zeros((B, P1 - n - D), jnp.float32))
    state_out[0] = jnp.concatenate(parts, axis=1)                        # [h2|ctC|pad]

    P2 = alpha_out.shape[2]
    aparts = [calpha, ap_new]
    if P2 > 2 * HW:
        aparts.append(jnp.zeros((B, P2 - 2 * HW), jnp.float32))
    alpha_out[0] = jnp.concatenate(aparts, axis=1)                       # [alpha|ap|pad]


# --------------------------------------------------------------------------- #
# Wrapper (layout transforms, hoisted precomputes, pallas_call plumbing)
# --------------------------------------------------------------------------- #
def gru_cond_forward(Wt, rembedding, re_embedding, rp, ly_mask,
                     context_nchw, context_mask, init_state):
    T, B, m = rembedding.shape
    n = init_state.shape[1]
    _, D, H, Wd = context_nchw.shape
    A = Wt['WaC_w'].shape[0]
    HW = H * Wd
    f32, bf16 = jnp.float32, jnp.bfloat16

    # ---- pctx_ = conv_UaC(context) + UaC_b + UfC_b (bias folded), HW on lanes ----
    ctx_hw_d = jnp.transpose(context_nchw, (0, 2, 3, 1)).reshape(B * HW, D)
    uac_t = jnp.transpose(Wt['UaC_w'][:, :, 0, 0])                      # (D, A)
    bias_a = (Wt['UaC_b'] + Wt['UfC_b'])[None, :]                       # (1, A)
    pctx = _flat_linear(ctx_hw_d.astype(bf16), uac_t.astype(bf16), bias_a)
    pctx = jnp.transpose(pctx.reshape(B, HW, A), (0, 2, 1)).astype(bf16)  # (B, A, HW)
    ctx = context_nchw.reshape(B, D, HW).astype(bf16)                   # (B, D, HW)
    cmask = context_mask.astype(f32).reshape(B, HW)

    # ---- state_below for ALL steps (hoisted out of the recurrence) ----------
    emb = jnp.concatenate([rembedding, re_embedding], axis=2).astype(f32)
    wy = jnp.concatenate([Wt['Wyz_w'].T, Wt['Wyr_w'].T, Wt['Wyh_w'].T], axis=1)
    wy_b = jnp.concatenate([Wt['Wyz_b'], Wt['Wyr_b'], Wt['Wyh_b']])[None, :]
    sb = _flat_linear(emb.reshape(T * B, 2 * m), wy, wy_b).reshape(T, B, 3 * n)

    # ---- conv_QC ∘ fc_UfC folded once; 3x3 boundary masks folded in ----------
    C = Wt['QC_w'].shape[0]
    wq9 = Wt['QC_w'][:, 0].reshape(C, 9)                                # (C, 9)
    fused9_T = Wt['UfC_w'] @ wq9                                        # (A, 9)
    hh = jnp.arange(H)[:, None]
    ww = jnp.arange(Wd)[None, :]
    masks, offs = [], []
    for dy in range(3):
        for dx in range(3):
            valid = ((hh + dy - 1 >= 0) & (hh + dy - 1 < H) &
                     (ww + dx - 1 >= 0) & (ww + dx - 1 < Wd))
            masks.append(valid.astype(f32).reshape(HW))
            offs.append((dy - 1) * Wd + (dx - 1))
    mask9 = jnp.stack(masks, axis=0)                                    # (9, HW)
    wm9 = fused9_T.T[:, :, None] * mask9[:, None, :]                    # (9, A, HW)

    # ---- grouped / transposed weights (glue only) ----------------------------
    u0 = jnp.concatenate([Wt['Uhz0_w'].T, Wt['Uhr0_w'].T, Wt['Uhh0_w'].T], axis=1)
    wacu2 = jnp.concatenate([Wt['WaC_w'].T, Wt['Uhz2_w'].T,
                             Wt['Uhr2_w'].T, Wt['Uhh2_w'].T], axis=1)   # (n, A+3n)
    u2_b = jnp.concatenate([Wt['Uhz2_b'], Wt['Uhr2_b'], Wt['Uhh2_b']])[None, :]
    vac_w = Wt['vaC_w'].T                                               # (A, 1)
    vac_b = Wt['vaC_b'][None, :]                                        # (1, 1)
    wc = jnp.concatenate([Wt['Wcz_w'].T, Wt['Wcr_w'].T, Wt['Wch_w'].T], axis=1)

    lym = ly_mask[:, :, None].astype(f32)                               # (T, B, 1)

    P1 = _round_up(n + D, 128)        # lane-dense [h2 | ctC | pad]
    P2 = _round_up(2 * HW, 128)       # lane-dense [alpha | alpha_past | pad]

    grid_spec = pltpu.PrefetchScalarGridSpec(
        num_scalar_prefetch=0,
        grid=(T,),
        in_specs=[
            pl.BlockSpec((B, n), lambda i: (0, 0)),                     # init_state
            pl.BlockSpec((1, B, 3 * n), lambda i: (i, 0, 0)),           # state_below
            pl.BlockSpec((1, B, 1), lambda i: (i, 0, 0)),               # ly_mask
            pl.BlockSpec((B, D, HW), lambda i: (0, 0, 0)),              # context (bf16)
            pl.BlockSpec((B, HW), lambda i: (0, 0)),                    # context_mask
            pl.BlockSpec((B, A, HW), lambda i: (0, 0, 0)),              # pctx_ (bf16)
            pl.BlockSpec((9, A, HW), lambda i: (0, 0, 0)),              # QC∘UfC ⊙ mask
            pl.BlockSpec((n, 3 * n), lambda i: (0, 0)),                 # Uh[z|r|h]0
            pl.BlockSpec((n, A + 3 * n), lambda i: (0, 0)),             # [WaC | Uh*2]
            pl.BlockSpec((1, 3 * n), lambda i: (0, 0)),                 # Uh*2 bias
            pl.BlockSpec((A, 1), lambda i: (0, 0)),                     # vaC
            pl.BlockSpec((1, 1), lambda i: (0, 0)),                     # vaC bias
            pl.BlockSpec((D, 3 * n), lambda i: (0, 0)),                 # Wc[z|r|h]
        ],
        out_specs=[
            pl.BlockSpec((1, B, P1), lambda i: (i, 0, 0)),              # [h2|ctC|pad]
            pl.BlockSpec((1, B, P2), lambda i: (i, 0, 0)),              # [alpha|ap|pad]
        ],
        scratch_shapes=[
            pltpu.VMEM((B, n), jnp.float32),          # h2t carry
            pltpu.VMEM((B, HW), jnp.float32),         # calpha_past carry (lane dense)
        ],
    )
    out_shape = (
        jax.ShapeDtypeStruct((T, B, P1), jnp.float32),
        jax.ShapeDtypeStruct((T, B, P2), jnp.float32),
    )
    state, alph = pl.pallas_call(
        functools.partial(_gru_cond_step_kernel, offs=tuple(offs)),
        grid_spec=grid_spec,
        out_shape=out_shape,
        compiler_params=pltpu.CompilerParams(
            dimension_semantics=("arbitrary",),
            vmem_limit_bytes=32 * 1024 * 1024),
    )(init_state.astype(f32), sb, lym, ctx, cmask, pctx,
      wm9, u0, wacu2, u2_b, vac_w, vac_b, wc)

    h2ts = state[:, :, :n]
    ctCs = state[:, :, n:n + D]
    calphas = alph[:, :, :HW].reshape(T, B, H, Wd)
    calpha_pasts = alph[:, :, HW:2 * HW].reshape(T, B, H, Wd)

    # ctP is never used inside the recurrence -> gather it in the wrapper.
    hist = jnp.concatenate([jnp.zeros((1, B, D), ctCs.dtype), ctCs], axis=0)  # (T+1,B,D)
    idx = jnp.broadcast_to(rp[:, :, None].astype(jnp.int32), (T, B, D))
    ctPs = jnp.take_along_axis(hist, idx, axis=0)

    return h2ts, ctCs, ctPs, calphas, calpha_pasts


# --------------------------------------------------------------------------- #
# Deterministic synthetic parameters (shapes from the module's __init__).
# Parent-branch layers (conv_UaP, fc_WaP, conv_QP, fc_UfP, fc_vaP, fc_Wy*0/1,
# fc_Uh*0/1, fc_relation) are never used by forward(), so they are not created.
# --------------------------------------------------------------------------- #
def init_weights(key, m, n, D, A):
    ks = iter(jax.random.split(key, 40))

    def nrm(shape, scale=0.08):
        return jax.random.normal(next(ks), shape, jnp.float32) * scale

    return {
        'Wyz_w': nrm((n, 2 * m)), 'Wyz_b': nrm((n,), 0.02),
        'Wyr_w': nrm((n, 2 * m)), 'Wyr_b': nrm((n,), 0.02),
        'Wyh_w': nrm((n, 2 * m)), 'Wyh_b': nrm((n,), 0.02),
        'Uhz0_w': nrm((n, n)), 'Uhr0_w': nrm((n, n)), 'Uhh0_w': nrm((n, n)),
        'UaC_w': nrm((A, D, 1, 1)), 'UaC_b': nrm((A,), 0.02),
        'WaC_w': nrm((A, n)),
        'QC_w': nrm((512, 1, 3, 3), 0.05),
        'UfC_w': nrm((A, 512), 0.02), 'UfC_b': nrm((A,), 0.02),
        'vaC_w': nrm((1, A)), 'vaC_b': nrm((1,), 0.02),
        'Uhz2_w': nrm((n, n)), 'Uhz2_b': nrm((n,), 0.02),
        'Uhr2_w': nrm((n, n)), 'Uhr2_b': nrm((n,), 0.02),
        'Uhh2_w': nrm((n, n)), 'Uhh2_b': nrm((n,), 0.02),
        'Wcz_w': nrm((n, D)), 'Wcr_w': nrm((n, D)), 'Wch_w': nrm((n, D)),
    }


# --------------------------------------------------------------------------- #
# Pure-JAX reference mirroring the PyTorch forward (unfused conv_QC + fc_UfC)
# --------------------------------------------------------------------------- #
def ref_forward(Wt, rembedding, re_embedding, rp, ly_mask, context_nchw,
                context_mask, init_state):
    T, B, m = rembedding.shape
    n = init_state.shape[1]
    _, D, H, Wd = context_nchw.shape
    ctx = jnp.transpose(context_nchw, (0, 2, 3, 1))
    pctx = jnp.einsum('bhwd,ad->bhwa', ctx, Wt['UaC_w'][:, :, 0, 0]) + Wt['UaC_b']
    emb = jnp.concatenate([rembedding, re_embedding], axis=2)
    sbz = emb @ Wt['Wyz_w'].T + Wt['Wyz_b']
    sbr = emb @ Wt['Wyr_w'].T + Wt['Wyr_b']
    sbh = emb @ Wt['Wyh_w'].T + Wt['Wyh_b']
    C = Wt['QC_w'].shape[0]
    wq9 = Wt['QC_w'][:, 0].reshape(C, 9)                                 # (C, 9)

    h = init_state
    ap = jnp.zeros((B, H, Wd), jnp.float32)
    hist = [jnp.zeros((B, D), jnp.float32)]
    h2s, ctcs, ctps, als, aps = [], [], [], [], []
    for i in range(T):
        lm = ly_mask[i][:, None]
        hist_arr = jnp.stack(hist, 0)
        ctP = jnp.stack([hist_arr[rp[i, j], j] for j in range(B)], 0)
        z0 = jax.nn.sigmoid(h @ Wt['Uhz0_w'].T + sbz[i])
        r0 = jax.nn.sigmoid(h @ Wt['Uhr0_w'].T + sbr[i])
        h0p = jnp.tanh((h @ Wt['Uhh0_w'].T) * r0 + sbh[i])
        h0 = z0 * h + (1 - z0) * h0p
        h0 = lm * h0 + (1 - lm) * h
        q = h0 @ Wt['WaC_w'].T
        pad = jnp.pad(ap, ((0, 0), (1, 1), (1, 1)))
        shifts = jnp.stack([pad[:, dy:dy + H, dx:dx + Wd]
                            for dy in range(3) for dx in range(3)], axis=-1)
        cover = jnp.einsum('bhwk,ck->bhwc', shifts, wq9)
        ccover = jnp.einsum('bhwc,ac->bhwa', cover, Wt['UfC_w']) + Wt['UfC_b']
        score = jnp.tanh(pctx + q[:, None, None, :] + ccover)
        logit = jnp.einsum('bhwa,a->bhw', score, Wt['vaC_w'][0]) + Wt['vaC_b'][0]
        logit = logit - logit.max()
        alpha = jnp.exp(logit) * context_mask
        alpha = alpha / alpha.sum(axis=(1, 2))[:, None, None] + 1e-10
        ap = ap + alpha
        ctC = jnp.einsum('bhwd,bhw->bd', ctx, alpha)
        z2 = jax.nn.sigmoid(h0 @ Wt['Uhz2_w'].T + Wt['Uhz2_b'] + ctC @ Wt['Wcz_w'].T)
        r2 = jax.nn.sigmoid(h0 @ Wt['Uhr2_w'].T + Wt['Uhr2_b'] + ctC @ Wt['Wcr_w'].T)
        h2p = jnp.tanh((h0 @ Wt['Uhh2_w'].T + Wt['Uhh2_b']) * r2 + ctC @ Wt['Wch_w'].T)
        h2 = z2 * h0 + (1 - z2) * h2p
        h2 = lm * h2 + (1 - lm) * h0
        h = h2
        hist.append(ctC)
        h2s.append(h2); ctcs.append(ctC); ctps.append(ctP); als.append(alpha); aps.append(ap)
    return (jnp.stack(h2s), jnp.stack(ctcs), jnp.stack(ctps),
            jnp.stack(als), jnp.stack(aps))


if __name__ == "__main__":
    m, n, D, A = 16, 32, 8, 32          # params['m'], ['n'], ['D'], ['dim_attention']
    T, B, H, Wd = 4, 2, 8, 16           # n_steps, n_samples, context H, W  (HW = 128)
    key = jax.random.PRNGKey(0)
    kw, k1, k2, k3, k4, k5 = jax.random.split(key, 6)
    Wt = init_weights(kw, m, n, D, A)

    rembedding = jax.random.normal(k1, (T, B, m), jnp.float32)
    re_embedding = jax.random.normal(k2, (T, B, m), jnp.float32)
    context = jax.random.normal(k3, (B, D, H, Wd), jnp.float32)      # NCHW like PyTorch
    init_state = jax.random.normal(k4, (B, n), jnp.float32) * 0.1
    context_mask = jnp.ones((B, H, Wd), jnp.float32).at[1, :, Wd - 2:].set(0.0)
    ly_mask = jnp.ones((T, B), jnp.float32).at[T - 1, 1].set(0.0)
    rp_keys = jax.random.split(k5, T)
    rp = jnp.stack([jax.random.randint(rp_keys[i], (B,), 0, i + 1)
                    for i in range(T)], 0).astype(jnp.int32)         # parent positions

    outs = gru_cond_forward(Wt, rembedding, re_embedding, rp, ly_mask,
                            context, context_mask, init_state)
    outs = jax.block_until_ready(outs)

    refs = ref_forward(Wt, rembedding, re_embedding, rp, ly_mask,
                       context, context_mask, init_state)
    names = ["h2ts", "ctCs", "ctPs", "calphas", "calpha_pasts"]
    for name, o, r in zip(names, outs, refs):
        assert o.shape == r.shape, (name, o.shape, r.shape)
        err = float(jnp.max(jnp.abs(o - r)))
        assert err < 5e-2, (name, err)
    print("KERNEL_OK")
</pallas_src>

<mosaic_0001>
module attributes {stable_mosaic.version = 11 : i64} {
  func.func @_linear_kernel(%arg0: i32, %arg1: memref<256x8xbf16, #tpu.memory_space<vmem>>, %arg2: memref<8x32xbf16, #tpu.memory_space<vmem>>, %arg3: memref<1x32xf32, #tpu.memory_space<vmem>>, %arg4: memref<256x32xf32, #tpu.memory_space<vmem>>) attributes {dimension_semantics = [#tpu.dimension_semantics<parallel>], iteration_bounds = array<i64: 1>, scalar_prefetch = 0 : i64, scratch_operands = 0 : i64, tpu.core_type = #tpu.core_type<tc>, window_params = [{transform_indices = @transform_0, window_bounds = array<i64: 256, 8>}, {pipeline_mode = #tpu.pipeline_mode<synchronous>, transform_indices = @transform_1, window_bounds = array<i64: 8, 32>}, {pipeline_mode = #tpu.pipeline_mode<synchronous>, transform_indices = @transform_2, window_bounds = array<i64: 1, 32>}, {transform_indices = @transform_3, window_bounds = array<i64: 256, 32>}]} {
    %c0 = arith.constant 0 : index
    %c0_0 = arith.constant 0 : index
    %0 = vector.load %arg1[%c0, %c0_0] : memref<256x8xbf16, #tpu.memory_space<vmem>>, vector<256x8xbf16>
    %c0_1 = arith.constant 0 : index
    %c0_2 = arith.constant 0 : index
    %1 = vector.load %arg2[%c0_1, %c0_2] : memref<8x32xbf16, #tpu.memory_space<vmem>>, vector<8x32xbf16>
    %cst = arith.constant dense<0.000000e+00> : vector<256x32xf32>
    %2 = tpu.matmul %0, %1, %cst {dimension_numbers = #tpu.dot_dimension_numbers<[1], [0], [0], [1], [0, 0, 1, 1], [], []>} : vector<256x8xbf16>, vector<8x32xbf16>, vector<256x32xf32> -> vector<256x32xf32>
    %c0_3 = arith.constant 0 : index
    %c0_4 = arith.constant 0 : index
    %3 = vector.load %arg3[%c0_3, %c0_4] : memref<1x32xf32, #tpu.memory_space<vmem>>, vector<1x32xf32>
    %4 = vector.broadcast %3 : vector<1x32xf32> to vector<256x32xf32>
    %5 = arith.addf %2, %4 : vector<256x32xf32>
    %c0_5 = arith.constant 0 : index
    %c0_6 = arith.constant 0 : index
    %6 = vector.load %arg4[%c0_5, %c0_6] : memref<256x32xf32, #tpu.memory_space<vmem>>, vector<256x32xf32>
    tpu.vector_store %arg4[%c0_5, %c0_6], %5 {strides = array<i32>} : memref<256x32xf32, #tpu.memory_space<vmem>>, vector<256x32xf32>,
    return
  }
  func.func @transform_0(%arg0: i32) -> (i32, i32) {
    %c0_i32 = arith.constant 0 : i32
    %c0_i32_0 = arith.constant 0 : i32
    return %arg0, %c0_i32 : i32, i32
  }
  func.func @transform_1(%arg0: i32) -> (i32, i32) {
    %c0_i32 = arith.constant 0 : i32
    %c0_i32_0 = arith.constant 0 : i32
    %c0_i32_1 = arith.constant 0 : i32
    return %c0_i32, %c0_i32_0 : i32, i32
  }
  func.func @transform_2(%arg0: i32) -> (i32, i32) {
    %c0_i32 = arith.constant 0 : i32
    %c0_i32_0 = arith.constant 0 : i32
    %c0_i32_1 = arith.constant 0 : i32
    return %c0_i32, %c0_i32_0 : i32, i32
  }
  func.func @transform_3(%arg0: i32) -> (i32, i32) {
    %c0_i32 = arith.constant 0 : i32
    %c0_i32_0 = arith.constant 0 : i32
    return %arg0, %c0_i32 : i32, i32
  }
}

</mosaic_0001>

<llo_original>
// kernel: tpu_custom_call.1
$region0: #{tpu_custom_call.1}
  #allocation0 [shape = 'u32[]', space=smem, size = 0x4, offset = 0x4, fixed_abs, tag = 'smem constant byte address 0x4 - core index']
  #allocation1 [shape = 'u32[144,128]{1,0:T(1,128)}', space=vmem, size = 0x12000, scoped, tag = 'internal scratch']
  %s0 = inlined_call_operand.vmem [shape: bf16[256,8], index: 0, kind: input, shape index: {}]
  %s1 = inlined_call_operand.vmem [shape: bf16[8,32], index: 1, kind: input, shape index: {}]
  %s2 = inlined_call_operand.vmem [shape: f32[1,32], index: 2, kind: input, shape index: {}]
  %s3 = inlined_call_operand.vmem [shape: f32[256,32], index: 3, kind: output, shape index: {}]
  %s4 = sld [smem:[#allocation0]]
  $region22: #{tpu_custom_call.1} parent=0
    _
  %s6 = ssub.s32 1, %s4
  %s7 = scalar_select 0, %s6, %s4
  // Predicated region
  $region2: #{tpu_custom_call.1} parent=0 // pred_check
    _
  $region3: #{tpu_custom_call.1} parent=0 // pred_check_branch
    %9 = sbr.rel (0) target = $region5
  $region4: #{tpu_custom_call.1} parent=0 // pred_region
    _
  $region5: #{tpu_custom_call.1} parent=0 // pred_fallthru
    _
  // Predicated region
  $region6: #{tpu_custom_call.1} parent=0 // pred_check
    _
  $region7: #{tpu_custom_call.1} parent=0 // pred_check_branch
    %11 = sbr.rel (0) target = $region9
  $region8: #{tpu_custom_call.1} parent=0 // pred_region
    _
  $region9: #{tpu_custom_call.1} parent=0 // pred_fallthru
    _
  // Predicated region
  $region10: #{tpu_custom_call.1} parent=0 // pred_check
    _
  $region11: #{tpu_custom_call.1} parent=0 // pred_check_branch
    %13 = sbr.rel (0) target = $region13
  $region12: #{tpu_custom_call.1} parent=0 // pred_region
    _
  $region13: #{tpu_custom_call.1} parent=0 // pred_fallthru
    _
  %v15 = vld [vmem:[%s0] sm:$0xf]
  %v16 = vld [vmem:[%s0 + $0x4] sm:$0xf]
  %v17 = vld [vmem:[%s0 + $0x8] sm:$0xf]
  %v18 = vld [vmem:[%s0 + $0xc] sm:$0xf]
  %v19 = vld [vmem:[%s0 + $0x10] sm:$0xf]
  %v20 = vld [vmem:[%s0 + $0x14] sm:$0xf]
  %v21 = vld [vmem:[%s0 + $0x18] sm:$0xf]
  %v22 = vld [vmem:[%s0 + $0x1c] sm:$0xf]
  %v23 = vld [vmem:[%s0 + $0x20] sm:$0xf]
  %v24 = vld [vmem:[%s0 + $0x24] sm:$0xf]
  %v25 = vld [vmem:[%s0 + $0x28] sm:$0xf]
  %v26 = vld [vmem:[%s0 + $0x2c] sm:$0xf]
  %v27 = vld [vmem:[%s0 + $0x30] sm:$0xf]
  %v28 = vld [vmem:[%s0 + $0x34] sm:$0xf]
  %v29 = vld [vmem:[%s0 + $0x38] sm:$0xf]
  %v30 = vld [vmem:[%s0 + $0x3c] sm:$0xf]
  %v31 = vld [vmem:[%s0 + $0x40] sm:$0xf]
  %v32 = vld [vmem:[%s0 + $0x44] sm:$0xf]
  %v33 = vld [vmem:[%s0 + $0x48] sm:$0xf]
  %v34 = vld [vmem:[%s0 + $0x4c] sm:$0xf]
  %v35 = vld [vmem:[%s0 + $0x50] sm:$0xf]
  %v36 = vld [vmem:[%s0 + $0x54] sm:$0xf]
  %v37 = vld [vmem:[%s0 + $0x58] sm:$0xf]
  %v38 = vld [vmem:[%s0 + $0x5c] sm:$0xf]
  %v39 = vld [vmem:[%s0 + $0x60] sm:$0xf]
  %v40 = vld [vmem:[%s0 + $0x64] sm:$0xf]
  %v41 = vld [vmem:[%s0 + $0x68] sm:$0xf]
  %v42 = vld [vmem:[%s0 + $0x6c] sm:$0xf]
  %v43 = vld [vmem:[%s0 + $0x70] sm:$0xf]
  %v44 = vld [vmem:[%s0 + $0x74] sm:$0xf]
  %v45 = vld [vmem:[%s0 + $0x78] sm:$0xf]
  %v46 = vld [vmem:[%s0 + $0x7c] sm:$0xf]
  %v47 = vld [vmem:[%s1] sm:$0xf]
  %v48 = vld [vmem:[%s2] sm:$0x1]
  %v50 = vlaneseq
  %v51 = vshrl.u32 %v50, 7
  %v52 = vsub.s32 0, %v51
  %v53 = vrot.slane %v48, %v52
  %v87 = vunpack.c.l.b16 %v15
  %v88 = vunpack.c.l.b16 %v16
  %v89 = vunpack.c.l.b16 %v17
  %v90 = vunpack.c.l.b16 %v18
  %v91 = vunpack.c.l.b16 %v19
  %v92 = vunpack.c.l.b16 %v20
  %v93 = vunpack.c.l.b16 %v21
  %v94 = vunpack.c.l.b16 %v22
  %v95 = vunpack.c.l.b16 %v23
  %v96 = vunpack.c.l.b16 %v24
  %v97 = vunpack.c.l.b16 %v25
  %v98 = vunpack.c.l.b16 %v26
  %v99 = vunpack.c.l.b16 %v27
  %v100 = vunpack.c.l.b16 %v28
  %v101 = vunpack.c.l.b16 %v29
  %v102 = vunpack.c.l.b16 %v30
  %v103 = vunpack.c.l.b16 %v31
  %v104 = vunpack.c.l.b16 %v32
  %v105 = vunpack.c.l.b16 %v33
  %v106 = vunpack.c.l.b16 %v34
  %v107 = vunpack.c.l.b16 %v35
  %v108 = vunpack.c.l.b16 %v36
  %v109 = vunpack.c.l.b16 %v37
  %v110 = vunpack.c.l.b16 %v38
  %v111 = vunpack.c.l.b16 %v39
  %v112 = vunpack.c.l.b16 %v40
  %v113 = vunpack.c.l.b16 %v41
  %v114 = vunpack.c.l.b16 %v42
  %v115 = vunpack.c.l.b16 %v43
  %v116 = vunpack.c.l.b16 %v44
  %v117 = vunpack.c.l.b16 %v45
  %v118 = vunpack.c.l.b16 %v46
  %v119 = vpack.c.b16 %v88, %v87
  %v120 = vpack.c.b16 %v90, %v89
  %v121 = vpack.c.b16 %v92, %v91
  %v122 = vpack.c.b16 %v94, %v93
  %v123 = vpack.c.b16 %v96, %v95
  %v124 = vpack.c.b16 %v98, %v97
  %v125 = vpack.c.b16 %v100, %v99
  %v126 = vpack.c.b16 %v102, %v101
  %v127 = vpack.c.b16 %v104, %v103
  %v128 = vpack.c.b16 %v106, %v105
  %v129 = vpack.c.b16 %v108, %v107
  %v130 = vpack.c.b16 %v110, %v109
  %v131 = vpack.c.b16 %v112, %v111
  %v132 = vpack.c.b16 %v114, %v113
  %v133 = vpack.c.b16 %v116, %v115
  %v134 = vpack.c.b16 %v118, %v117
  %vm135 = vcmask 64512
  %v137 = vsel %vm135, %v119, 0
  %v140 = vsel %vm135, %v120, 0
  %v143 = vsel %vm135, %v121, 0
  %v146 = vsel %vm135, %v122, 0
  %v149 = vsel %vm135, %v123, 0
  %v152 = vsel %vm135, %v124, 0
  %v155 = vsel %vm135, %v125, 0
  %v158 = vsel %vm135, %v126, 0
  %v161 = vsel %vm135, %v127, 0
  %v164 = vsel %vm135, %v128, 0
  %v167 = vsel %vm135, %v129, 0
  %v170 = vsel %vm135, %v130, 0
  %v173 = vsel %vm135, %v131, 0
  %v176 = vsel %vm135, %v132, 0
  %v179 = vsel %vm135, %v133, 0
  %v182 = vsel %vm135, %v134, 0
  %vm184 = vcmask 1043456
  %v186 = vsel %vm184, %v47, 0
  %188 = vmatprep.subr.bf16.mxu0 0
  %189 = vmatpush1.bf16.msra.mxu0 %v186
  %190 = vmatprep.subr.bf16.mxu0 0
  %191 = vmatpush1.bf16.msra.mxu0 0
  %192 = vmatprep.subr.bf16.mxu0 0
  %193 = vmatpush1.bf16.msra.mxu0 0
  %194 = vmatprep.subr.bf16.mxu0 0
  %195 = vmatpush1.bf16.msra.mxu0 0
  %196 = vmatprep.subr.bf16.mxu0 0
  %197 = vmatpush1.bf16.msra.mxu0 0
  %198 = vmatprep.subr.bf16.mxu0 0
  %199 = vmatpush1.bf16.msra.mxu0 0
  %200 = vmatprep.subr.bf16.mxu0 0
  %201 = vmatpush1.bf16.msra.mxu0 0
  %202 = vmatprep.subr.bf16.mxu0 0
  %203 = vmatpush1.bf16.msra.mxu0 0
  %204 = vmatprep.subr.bf16.mxu0 0
  %205 = vmatpush1.bf16.msra.mxu0 0
  %206 = vmatprep.subr.bf16.mxu0 0
  %207 = vmatpush1.bf16.msra.mxu0 0
  %208 = vmatprep.subr.bf16.mxu0 0
  %209 = vmatpush1.bf16.msra.mxu0 0
  %210 = vmatprep.subr.bf16.mxu0 0
  %211 = vmatpush1.bf16.msra.mxu0 0
  %212 = vmatprep.subr.bf16.mxu0 0
  %213 = vmatpush1.bf16.msra.mxu0 0
  %214 = vmatprep.subr.bf16.mxu0 0
  %215 = vmatpush1.bf16.msra.mxu0 0
  %216 = vmatprep.subr.bf16.mxu0 0
  %217 = vmatpush1.bf16.msra.mxu0 0
  %218 = vmatprep.subr.bf16.mxu0 0
  %219 = vmatpush1.bf16.msra.mxu0 0
  %220 = vmatprep.mubr.bf16.mxu0 0
  %221 = vmatmul.mubr.bf16.gmra.mrb[0].mxu0 %v137
  %v222 = vpop.f32.mrb[0].mxu0
  %v223 = vadd.f32 %v53, %v222
  %v224 = vpop.f32.mrb[0].mxu0
  %v225 = vpop.f32.mrb[0].mxu0
  %v226 = vadd.f32 %v53, %v225
  %v227 = vpop.f32.mrb[0].mxu0
  %228 = vmatprep.mubr.bf16.mxu0 0
  %229 = vmatmul.mubr.bf16.gmra.mrb[0].mxu0 %v140
  %v230 = vpop.f32.mrb[0].mxu0
  %v231 = vadd.f32 %v53, %v230
  %v232 = vpop.f32.mrb[0].mxu0
  %v233 = vpop.f32.mrb[0].mxu0
  %v234 = vadd.f32 %v53, %v233
  %v235 = vpop.f32.mrb[0].mxu0
  %236 = vmatprep.mubr.bf16.mxu0 0
  %237 = vmatmul.mubr.bf16.gmra.mrb[0].mxu0 %v143
  %v238 = vpop.f32.mrb[0].mxu0
  %v239 = vadd.f32 %v53, %v238
  %v240 = vpop.f32.mrb[0].mxu0
  %v241 = vpop.f32.mrb[0].mxu0
  %v242 = vadd.f32 %v53, %v241
  %v243 = vpop.f32.mrb[0].mxu0
  %244 = vmatprep.mubr.bf16.mxu0 0
  %245 = vmatmul.mubr.bf16.gmra.mrb[0].mxu0 %v146
  %v246 = vpop.f32.mrb[0].mxu0
  %v247 = vadd.f32 %v53, %v246
  %v248 = vpop.f32.mrb[0].mxu0
  %v249 = vpop.f32.mrb[0].mxu0
  %v250 = vadd.f32 %v53, %v249
  %v251 = vpop.f32.mrb[0].mxu0
  %252 = vmatprep.mubr.bf16.mxu0 0
  %253 = vmatmul.mubr.bf16.gmra.mrb[0].mxu0 %v149
  %v254 = vpop.f32.mrb[0].mxu0
  %v255 = vadd.f32 %v53, %v254
  %v256 = vpop.f32.mrb[0].mxu0
  %v257 = vpop.f32.mrb[0].mxu0
  %v258 = vadd.f32 %v53, %v257
  %v259 = vpop.f32.mrb[0].mxu0
  %260 = vmatprep.mubr.bf16.mxu0 0
  %261 = vmatmul.mubr.bf16.gmra.mrb[0].mxu0 %v152
  %v262 = vpop.f32.mrb[0].mxu0
  %v263 = vadd.f32 %v53, %v262
  %v264 = vpop.f32.mrb[0].mxu0
  %v265 = vpop.f32.mrb[0].mxu0
  %v266 = vadd.f32 %v53, %v265
  %v267 = vpop.f32.mrb[0].mxu0
  %268 = vmatprep.mubr.bf16.mxu0 0
  %269 = vmatmul.mubr.bf16.gmra.mrb[0].mxu0 %v155
  %v270 = vpop.f32.mrb[0].mxu0
  %v271 = vadd.f32 %v53, %v270
  %v272 = vpop.f32.mrb[0].mxu0
  %v273 = vpop.f32.mrb[0].mxu0
  %v274 = vadd.f32 %v53, %v273
  %v275 = vpop.f32.mrb[0].mxu0
  %276 = vmatprep.mubr.bf16.mxu0 0
  %277 = vmatmul.mubr.bf16.gmra.mrb[0].mxu0 %v158
  %v278 = vpop.f32.mrb[0].mxu0
  %v279 = vadd.f32 %v53, %v278
  %v280 = vpop.f32.mrb[0].mxu0
  %v281 = vpop.f32.mrb[0].mxu0
  %v282 = vadd.f32 %v53, %v281
  %v283 = vpop.f32.mrb[0].mxu0
  %284 = vmatprep.mubr.bf16.mxu0 0
  %285 = vmatmul.mubr.bf16.gmra.mrb[0].mxu0 %v161
  %v286 = vpop.f32.mrb[0].mxu0
  %v287 = vadd.f32 %v53, %v286
  %v288 = vpop.f32.mrb[0].mxu0
  %v289 = vpop.f32.mrb[0].mxu0
  %v290 = vadd.f32 %v53, %v289
  %v291 = vpop.f32.mrb[0].mxu0
  %292 = vmatprep.mubr.bf16.mxu0 0
  %293 = vmatmul.mubr.bf16.gmra.mrb[0].mxu0 %v164
  %v294 = vpop.f32.mrb[0].mxu0
  %v295 = vadd.f32 %v53, %v294
  %v296 = vpop.f32.mrb[0].mxu0
  %v297 = vpop.f32.mrb[0].mxu0
  %v298 = vadd.f32 %v53, %v297
  %v299 = vpop.f32.mrb[0].mxu0
  %300 = vmatprep.mubr.bf16.mxu0 0
  %301 = vmatmul.mubr.bf16.gmra.mrb[0].mxu0 %v167
  %v302 = vpop.f32.mrb[0].mxu0
  %v303 = vadd.f32 %v53, %v302
  %v304 = vpop.f32.mrb[0].mxu0
  %v305 = vpop.f32.mrb[0].mxu0
  %v306 = vadd.f32 %v53, %v305
  %v307 = vpop.f32.mrb[0].mxu0
  %308 = vmatprep.mubr.bf16.mxu0 0
  %309 = vmatmul.mubr.bf16.gmra.mrb[0].mxu0 %v170
  %v310 = vpop.f32.mrb[0].mxu0
  %v311 = vadd.f32 %v53, %v310
  %v312 = vpop.f32.mrb[0].mxu0
  %v313 = vpop.f32.mrb[0].mxu0
  %v314 = vadd.f32 %v53, %v313
  %v315 = vpop.f32.mrb[0].mxu0
  %316 = vmatprep.mubr.bf16.mxu0 0
  %317 = vmatmul.mubr.bf16.gmra.mrb[0].mxu0 %v173
  %v318 = vpop.f32.mrb[0].mxu0
  %v319 = vadd.f32 %v53, %v318
  %v320 = vpop.f32.mrb[0].mxu0
  %v321 = vpop.f32.mrb[0].mxu0
  %v322 = vadd.f32 %v53, %v321
  %v323 = vpop.f32.mrb[0].mxu0
  %324 = vmatprep.mubr.bf16.mxu0 0
  %325 = vmatmul.mubr.bf16.gmra.mrb[0].mxu0 %v176
  %v326 = vpop.f32.mrb[0].mxu0
  %v327 = vadd.f32 %v53, %v326
  %v328 = vpop.f32.mrb[0].mxu0
  %v329 = vpop.f32.mrb[0].mxu0
  %v330 = vadd.f32 %v53, %v329
  %v331 = vpop.f32.mrb[0].mxu0
  %332 = vmatprep.mubr.bf16.mxu0 0
  %333 = vmatmul.mubr.bf16.gmra.mrb[0].mxu0 %v179
  %v334 = vpop.f32.mrb[0].mxu0
  %v335 = vadd.f32 %v53, %v334
  %v336 = vpop.f32.mrb[0].mxu0
  %v337 = vpop.f32.mrb[0].mxu0
  %v338 = vadd.f32 %v53, %v337
  %v339 = vpop.f32.mrb[0].mxu0
  %340 = vmatprep.mubr.bf16.mxu0 0
  %341 = vmatmul.mubr.bf16.gmra.mrb[0].mxu0 %v182
  %v342 = vpop.f32.mrb[0].mxu0
  %v343 = vadd.f32 %v53, %v342
  %v344 = vpop.f32.mrb[0].mxu0
  %v345 = vpop.f32.mrb[0].mxu0
  %v346 = vadd.f32 %v53, %v345
  %v347 = vpop.f32.mrb[0].mxu0
  %348 = vdwg.mxu0
  %vm349 = vcmask 261120
  %350 = vst.msk [vmem:[%s3] sm:$0xff] %vm349, %v223
  %351 = vst.msk [vmem:[%s3 + $0x8] sm:$0xff] %vm349, %v226
  %352 = vst.msk [vmem:[%s3 + $0x10] sm:$0xff] %vm349, %v231
  %353 = vst.msk [vmem:[%s3 + $0x18] sm:$0xff] %vm349, %v234
  %354 = vst.msk [vmem:[%s3 + $0x20] sm:$0xff] %vm349, %v239
  %355 = vst.msk [vmem:[%s3 + $0x28] sm:$0xff] %vm349, %v242
  %356 = vst.msk [vmem:[%s3 + $0x30] sm:$0xff] %vm349, %v247
  %357 = vst.msk [vmem:[%s3 + $0x38] sm:$0xff] %vm349, %v250
  %358 = vst.msk [vmem:[%s3 + $0x40] sm:$0xff] %vm349, %v255
  %359 = vst.msk [vmem:[%s3 + $0x48] sm:$0xff] %vm349, %v258
  %360 = vst.msk [vmem:[%s3 + $0x50] sm:$0xff] %vm349, %v263
  %361 = vst.msk [vmem:[%s3 + $0x58] sm:$0xff] %vm349, %v266
  %362 = vst.msk [vmem:[%s3 + $0x60] sm:$0xff] %vm349, %v271
  %363 = vst.msk [vmem:[%s3 + $0x68] sm:$0xff] %vm349, %v274
  %364 = vst.msk [vmem:[%s3 + $0x70] sm:$0xff] %vm349, %v279
  %365 = vst.msk [vmem:[%s3 + $0x78] sm:$0xff] %vm349, %v282
  %366 = vst.msk [vmem:[%s3 + $0x80] sm:$0xff] %vm349, %v287
  %367 = vst.msk [vmem:[%s3 + $0x88] sm:$0xff] %vm349, %v290
  %368 = vst.msk [vmem:[%s3 + $0x90] sm:$0xff] %vm349, %v295
  %369 = vst.msk [vmem:[%s3 + $0x98] sm:$0xff] %vm349, %v298
  %370 = vst.msk [vmem:[%s3 + $0xa0] sm:$0xff] %vm349, %v303
  %371 = vst.msk [vmem:[%s3 + $0xa8] sm:$0xff] %vm349, %v306
  %372 = vst.msk [vmem:[%s3 + $0xb0] sm:$0xff] %vm349, %v311
  %373 = vst.msk [vmem:[%s3 + $0xb8] sm:$0xff] %vm349, %v314
  %374 = vst.msk [vmem:[%s3 + $0xc0] sm:$0xff] %vm349, %v319
  %375 = vst.msk [vmem:[%s3 + $0xc8] sm:$0xff] %vm349, %v322
  %376 = vst.msk [vmem:[%s3 + $0xd0] sm:$0xff] %vm349, %v327
  %377 = vst.msk [vmem:[%s3 + $0xd8] sm:$0xff] %vm349, %v330
  %378 = vst.msk [vmem:[%s3 + $0xe0] sm:$0xff] %vm349, %v335
  %379 = vst.msk [vmem:[%s3 + $0xe8] sm:$0xff] %vm349, %v338
  %380 = vst.msk [vmem:[%s3 + $0xf0] sm:$0xff] %vm349, %v343
  %381 = vst.msk [vmem:[%s3 + $0xf8] sm:$0xff] %vm349, %v346
  // Predicated region
  $region14: #{tpu_custom_call.1} parent=0 // pred_check
    _
  $region15: #{tpu_custom_call.1} parent=0 // pred_check_branch
    %383 = sbr.rel (0) target = $region17
  $region16: #{tpu_custom_call.1} parent=0 // pred_region
    _
  $region17: #{tpu_custom_call.1} parent=0 // pred_fallthru
    _
  // Predicated region
  $region18: #{tpu_custom_call.1} parent=0 // pred_check
    _
  $region19: #{tpu_custom_call.1} parent=0 // pred_check_branch
    %385 = sbr.rel (0) target = $region21
  $region20: #{tpu_custom_call.1} parent=0 // pred_region
    _
  $region21: #{tpu_custom_call.1} parent=0 // pred_fallthru
    _

</llo_original>
